<compile_context>
chip_gen: v7x
topology: tpu7x:2x2x1
jax: 0.10.0
libtpu: 0.0.40
codegen_flags: <defaults>
</compile_context>

<pallas_src>
import functools
import jax
import jax.numpy as jnp
from jax.experimental import pallas as pl
from jax.experimental.pallas import tpu as pltpu

IN_DIM = 512
HID_DIM = 256
OUT_DIM = 128


def _siamese_kernel(x_ref, w1_ref, b1_ref, w2_ref, b2_ref, o_ref):
    # x_ref:  (tile_b, 512) bf16   w1_ref: (512, 256) bf16   b1_ref: (1, 256) f32
    # w2_ref: (256, 128) bf16      b2_ref: (1, 128) f32      o_ref:  (tile_b, 128)
    h = jnp.dot(x_ref[...], w1_ref[...], preferred_element_type=jnp.float32)
    h = jnp.maximum(h + b1_ref[...], 0.0)              # bias + ReLU in f32
    y = jnp.dot(h.astype(w2_ref.dtype), w2_ref[...],   # bf16 operands, f32 acc
                preferred_element_type=jnp.float32)
    o_ref[...] = (y + b2_ref[...]).astype(o_ref.dtype)


def _round_up(n, m):
    return ((n + m - 1) // m) * m


def siamese_forward_pallas(params, text_feature, image_feature, *, tile_b=256):
    """Fused two-tower MLP forward. Returns (text_out, image_out)."""
    B = text_feature.shape[0]
    assert image_feature.shape[0] == B
    out_dtype = text_feature.dtype

    # Adaptive batch tile: small batches -> one grid step per tower; large
    # batches tile at tile_b (>=256 to saturate the MXU M dimension).
    tb = min(tile_b, _round_up(B, 8))
    B_pad = _round_up(B, tb)

    def pad(x):
        return jnp.pad(x, ((0, B_pad - B), (0, 0))) if B_pad != B else x

    # Stack towers along a leading axis: 0 = text, 1 = image.
    x = jnp.stack([pad(text_feature), pad(image_feature)]).astype(jnp.bfloat16)
    w1 = jnp.stack([params["text"]["w1"], params["image"]["w1"]]).astype(jnp.bfloat16)
    w2 = jnp.stack([params["text"]["w2"], params["image"]["w2"]]).astype(jnp.bfloat16)
    b1 = jnp.stack([params["text"]["b1"], params["image"]["b1"]]
                   ).reshape(2, 1, HID_DIM).astype(jnp.float32)
    b2 = jnp.stack([params["text"]["b2"], params["image"]["b2"]]
                   ).reshape(2, 1, OUT_DIM).astype(jnp.float32)

    grid = (2, B_pad // tb)  # (tower, batch-tile); both parallel

    out = pl.pallas_call(
        _siamese_kernel,
        out_shape=jax.ShapeDtypeStruct((2, B_pad, OUT_DIM), out_dtype),
        grid_spec=pl.GridSpec(
            grid=grid,
            in_specs=[
                # x: per-tower, per-batch-tile block (tower axis squeezed).
                pl.BlockSpec((None, tb, IN_DIM), lambda t, i: (t, i, 0)),
                # Weights/biases: constant in the batch axis -> VMEM-resident
                # across all batch tiles of a tower.
                pl.BlockSpec((None, IN_DIM, HID_DIM), lambda t, i: (t, 0, 0)),
                pl.BlockSpec((None, 1, HID_DIM), lambda t, i: (t, 0, 0)),
                pl.BlockSpec((None, HID_DIM, OUT_DIM), lambda t, i: (t, 0, 0)),
                pl.BlockSpec((None, 1, OUT_DIM), lambda t, i: (t, 0, 0)),
            ],
            out_specs=pl.BlockSpec((None, tb, OUT_DIM), lambda t, i: (t, i, 0)),
        ),
        compiler_params=pltpu.CompilerParams(
            dimension_semantics=("parallel", "parallel")),
    )(x, w1, b1, w2, b2)

    return out[0, :B], out[1, :B]


def _init_linear(key, fan_in, fan_out, dtype=jnp.float32):
    """torch.nn.Linear default init: U(-1/sqrt(fan_in), 1/sqrt(fan_in)).

    Weight stored as (fan_in, fan_out) so the kernel computes x @ W.
    """
    kw, kb = jax.random.split(key)
    bound = 1.0 / (fan_in ** 0.5)
    w = jax.random.uniform(kw, (fan_in, fan_out), dtype, -bound, bound)
    b = jax.random.uniform(kb, (fan_out,), dtype, -bound, bound)
    return w, b


def make_siamese_params(key):
    k = jax.random.split(key, 4)
    text = {}
    text["w1"], text["b1"] = _init_linear(k[0], IN_DIM, HID_DIM)
    text["w2"], text["b2"] = _init_linear(k[1], HID_DIM, OUT_DIM)
    image = {}
    image["w1"], image["b1"] = _init_linear(k[2], IN_DIM, HID_DIM)
    image["w2"], image["b2"] = _init_linear(k[3], HID_DIM, OUT_DIM)
    return {"text": text, "image": image}


@functools.partial(jax.jit, static_argnames=("tile_b",))
def siamese_forward(params, text_feature, image_feature, tile_b=256):
    return siamese_forward_pallas(params, text_feature, image_feature,
                                  tile_b=tile_b)


def _reference_forward(params, text_feature, image_feature):
    def mlp(p, x):
        h = jnp.maximum(x @ p["w1"] + p["b1"], 0.0)
        return h @ p["w2"] + p["b2"]
    return mlp(params["text"], text_feature), mlp(params["image"], image_feature)


if __name__ == "__main__":
    key = jax.random.PRNGKey(0)
    kp, kt, ki = jax.random.split(key, 3)

    B = 8  # small batch (padded/tiled automatically by the wrapper)
    params = make_siamese_params(kp)
    text_feature = jax.random.normal(kt, (B, IN_DIM), jnp.float32)
    image_feature = jax.random.normal(ki, (B, IN_DIM), jnp.float32)

    out1, out2 = siamese_forward(params, text_feature, image_feature)
    jax.block_until_ready((out1, out2))

    # Sanity check against a plain-JAX f32 reference (kernel uses bf16 matmul
    # operands with f32 accumulation, so tolerance is loosened accordingly).
    ref1, ref2 = _reference_forward(params, text_feature, image_feature)
    assert out1.shape == (B, OUT_DIM) and out2.shape == (B, OUT_DIM)
    assert jnp.allclose(out1, ref1, atol=5e-2, rtol=5e-2)
    assert jnp.allclose(out2, ref2, atol=5e-2, rtol=5e-2)

    print("KERNEL_OK")
</pallas_src>

<mosaic_0001>
module attributes {stable_mosaic.version = 11 : i64} {
  func.func @_siamese_kernel(%arg0: i32, %arg1: i32, %arg2: memref<1x8x512xbf16, #tpu.memory_space<vmem>>, %arg3: memref<1x512x256xbf16, #tpu.memory_space<vmem>>, %arg4: memref<1x1x256xf32, #tpu.memory_space<vmem>>, %arg5: memref<1x256x128xbf16, #tpu.memory_space<vmem>>, %arg6: memref<1x1x128xf32, #tpu.memory_space<vmem>>, %arg7: memref<1x8x128xf32, #tpu.memory_space<vmem>>) attributes {dimension_semantics = [#tpu.dimension_semantics<parallel>, #tpu.dimension_semantics<parallel>], iteration_bounds = array<i64: 2, 1>, scalar_prefetch = 0 : i64, scratch_operands = 0 : i64, tpu.core_type = #tpu.core_type<tc>, window_params = [{transform_indices = @transform_0, window_bounds = array<i64: 1, 8, 512>}, {transform_indices = @transform_1, window_bounds = array<i64: 1, 512, 256>}, {transform_indices = @transform_2, window_bounds = array<i64: 1, 1, 256>}, {transform_indices = @transform_3, window_bounds = array<i64: 1, 256, 128>}, {transform_indices = @transform_4, window_bounds = array<i64: 1, 1, 128>}, {transform_indices = @transform_5, window_bounds = array<i64: 1, 8, 128>}]} {
    %c0 = arith.constant 0 : index
    %c0_0 = arith.constant 0 : index
    %c0_1 = arith.constant 0 : index
    %0 = vector.load %arg2[%c0, %c0_0, %c0_1] : memref<1x8x512xbf16, #tpu.memory_space<vmem>>, vector<1x8x512xbf16>
    %1 = vector.shape_cast %0 : vector<1x8x512xbf16> to vector<8x512xbf16>
    %c0_2 = arith.constant 0 : index
    %c0_3 = arith.constant 0 : index
    %c0_4 = arith.constant 0 : index
    %2 = vector.load %arg3[%c0_2, %c0_3, %c0_4] : memref<1x512x256xbf16, #tpu.memory_space<vmem>>, vector<1x512x256xbf16>
    %3 = vector.shape_cast %2 : vector<1x512x256xbf16> to vector<512x256xbf16>
    %cst = arith.constant dense<0.000000e+00> : vector<8x256xf32>
    %4 = tpu.matmul %1, %3, %cst {dimension_numbers = #tpu.dot_dimension_numbers<[1], [0], [0], [1], [0, 0, 1, 1], [], []>} : vector<8x512xbf16>, vector<512x256xbf16>, vector<8x256xf32> -> vector<8x256xf32>
    %c0_5 = arith.constant 0 : index
    %c0_6 = arith.constant 0 : index
    %c0_7 = arith.constant 0 : index
    %5 = vector.load %arg4[%c0_5, %c0_6, %c0_7] : memref<1x1x256xf32, #tpu.memory_space<vmem>>, vector<1x1x256xf32>
    %6 = vector.shape_cast %5 : vector<1x1x256xf32> to vector<1x256xf32>
    %7 = vector.broadcast %6 : vector<1x256xf32> to vector<8x256xf32>
    %8 = arith.addf %4, %7 : vector<8x256xf32>
    %cst_8 = arith.constant 0.000000e+00 : f32
    %9 = vector.broadcast %cst_8 : f32 to vector<8x256xf32>
    %10 = arith.maximumf %8, %9 : vector<8x256xf32>
    %11 = arith.truncf %10 : vector<8x256xf32> to vector<8x256xbf16>
    %c0_9 = arith.constant 0 : index
    %c0_10 = arith.constant 0 : index
    %c0_11 = arith.constant 0 : index
    %12 = vector.load %arg5[%c0_9, %c0_10, %c0_11] : memref<1x256x128xbf16, #tpu.memory_space<vmem>>, vector<1x256x128xbf16>
    %13 = vector.shape_cast %12 : vector<1x256x128xbf16> to vector<256x128xbf16>
    %cst_12 = arith.constant dense<0.000000e+00> : vector<8x128xf32>
    %14 = tpu.matmul %11, %13, %cst_12 {dimension_numbers = #tpu.dot_dimension_numbers<[1], [0], [0], [1], [0, 0, 1, 1], [], []>} : vector<8x256xbf16>, vector<256x128xbf16>, vector<8x128xf32> -> vector<8x128xf32>
    %c0_13 = arith.constant 0 : index
    %c0_14 = arith.constant 0 : index
    %c0_15 = arith.constant 0 : index
    %15 = vector.load %arg6[%c0_13, %c0_14, %c0_15] : memref<1x1x128xf32, #tpu.memory_space<vmem>>, vector<1x1x128xf32>
    %16 = vector.shape_cast %15 : vector<1x1x128xf32> to vector<1x128xf32>
    %17 = vector.broadcast %16 : vector<1x128xf32> to vector<8x128xf32>
    %18 = arith.addf %14, %17 : vector<8x128xf32>
    %c0_16 = arith.constant 0 : index
    %c0_17 = arith.constant 0 : index
    %c0_18 = arith.constant 0 : index
    %19 = vector.load %arg7[%c0_16, %c0_17, %c0_18] : memref<1x8x128xf32, #tpu.memory_space<vmem>>, vector<1x8x128xf32>
    %20 = vector.shape_cast %19 : vector<1x8x128xf32> to vector<8x128xf32>
    %21 = vector.shape_cast %18 : vector<8x128xf32> to vector<1x8x128xf32>
    tpu.vector_store %arg7[%c0_16, %c0_17, %c0_18], %21 {strides = array<i32>} : memref<1x8x128xf32, #tpu.memory_space<vmem>>, vector<1x8x128xf32>,
    return
  }
  func.func @transform_0(%arg0: i32, %arg1: i32) -> (i32, i32, i32) {
    %c0_i32 = arith.constant 0 : i32
    %c0_i32_0 = arith.constant 0 : i32
    return %arg0, %arg1, %c0_i32 : i32, i32, i32
  }
  func.func @transform_1(%arg0: i32, %arg1: i32) -> (i32, i32, i32) {
    %c0_i32 = arith.constant 0 : i32
    %c0_i32_0 = arith.constant 0 : i32
    %c0_i32_1 = arith.constant 0 : i32
    return %arg0, %c0_i32, %c0_i32_0 : i32, i32, i32
  }
  func.func @transform_2(%arg0: i32, %arg1: i32) -> (i32, i32, i32) {
    %c0_i32 = arith.constant 0 : i32
    %c0_i32_0 = arith.constant 0 : i32
    %c0_i32_1 = arith.constant 0 : i32
    return %arg0, %c0_i32, %c0_i32_0 : i32, i32, i32
  }
  func.func @transform_3(%arg0: i32, %arg1: i32) -> (i32, i32, i32) {
    %c0_i32 = arith.constant 0 : i32
    %c0_i32_0 = arith.constant 0 : i32
    %c0_i32_1 = arith.constant 0 : i32
    return %arg0, %c0_i32, %c0_i32_0 : i32, i32, i32
  }
  func.func @transform_4(%arg0: i32, %arg1: i32) -> (i32, i32, i32) {
    %c0_i32 = arith.constant 0 : i32
    %c0_i32_0 = arith.constant 0 : i32
    %c0_i32_1 = arith.constant 0 : i32
    return %arg0, %c0_i32, %c0_i32_0 : i32, i32, i32
  }
  func.func @transform_5(%arg0: i32, %arg1: i32) -> (i32, i32, i32) {
    %c0_i32 = arith.constant 0 : i32
    %c0_i32_0 = arith.constant 0 : i32
    return %arg0, %arg1, %c0_i32 : i32, i32, i32
  }
}

</mosaic_0001>

<llo_original>
// kernel: siamese_forward.1
$region0: #{siamese_forward.1}
  #allocation0 [shape = 'u32[]', space=smem, size = 0x4, offset = 0x4, fixed_abs, tag = 'smem constant byte address 0x4 - core index']
  #allocation1 [shape = 'u32[144,128]{1,0:T(1,128)}', space=vmem, size = 0x12000, scoped, tag = 'internal scratch']
  %s0 = inlined_call_operand.vmem [shape: bf16[2,8,512], index: 0, kind: input, shape index: {}]
  %s1 = inlined_call_operand.vmem [shape: bf16[2,512,256], index: 1, kind: input, shape index: {}]
  %s2 = inlined_call_operand.vmem [shape: f32[2,1,256], index: 2, kind: input, shape index: {}]
  %s3 = inlined_call_operand.vmem [shape: bf16[2,256,128], index: 3, kind: input, shape index: {}]
  %s4 = inlined_call_operand.vmem [shape: f32[2,1,128], index: 4, kind: input, shape index: {}]
  %s5 = inlined_call_operand.vmem [shape: f32[2,8,128], index: 5, kind: output, shape index: {}]
  %s6 = sld [smem:[#allocation0]]
  $region53: #{siamese_forward.1} parent=0
    _
  %s8 = ssub.s32 1, %s6
  %s9 = scalar_select 0, %s8, %s6
  loop: start=0, step=1, limit=4
  $region2: #{siamese_forward.1} parent=0 // loop_pre_header
    _
  $region3: #{siamese_forward.1} parent=0 // loop_header
    %s11 = sphi 0, %s15
    %p12 = scmp.ge.s32.totalorder %s11, 4
    %s18 = sphi 0, %s30
    %s19 = sphi 0, %s26
    %s20 = sphi 0, %s18
    %s21 = sphi 0, %s19
    %s22 = sphi 0, %s20
    %s23 = sphi 0, %s21
    %s35 = sphi 0, %s37
    %s38 = sphi 0, %s35
    %s39 = sphi 0, %s38
    %s55 = sphi 0, %s39
    %s61 = sphi 0, %s63
    %s64 = sphi 0, %s61
    %s65 = sphi 0, %s64
    %s81 = sphi 0, %s65
    %s87 = sphi 0, %s89
    %s90 = sphi 0, %s87
    %s91 = sphi 0, %s90
    %s107 = sphi 0, %s91
    %s113 = sphi 0, %s115
    %s116 = sphi 0, %s113
    %s117 = sphi 0, %s116
    %s133 = sphi 0, %s117
    %s139 = sphi 0, %s141
    %s142 = sphi 0, %s139
    %s143 = sphi 0, %s142
    %s159 = sphi 0, %s143
    %s167 = sphi 0, %s169
    %s170 = sphi 0, %s167
    %s171 = sphi 0, %s170
    %s187 = sphi 0, %s171
  $region4: #{siamese_forward.1} parent=0 // loop_header_branch
    %14 = sbr.rel (%p12) target = $region8
  $region5: #{siamese_forward.1} parent=0 // loop_body
    %s16 = ssub.s32 %s11, 1
    %s17 = ssub.s32 %s11, 2
    %s24 = sadd.s32 1, %s19
    %p25 = scmp.ge.s32.totalorder %s24, 1
    %s26 = scalar_select %p25, 0, %s24
    %s27 = sadd.s32 1, %s18
    %s28 = scalar_select %p25, %s27, %s18
    %p29 = scmp.ge.s32.totalorder %s28, 2
    %s30 = scalar_select %p29, 0, %s28
    %s31 = ssub.s32 %s18, %s30
    %s32 = ssub.s32 %s19, %s26
    %s33 = sor.u32 %s31, %s32
    %p34 = scmp.eq.s32.totalorder %s33, 0
    %s36 = sadd.s32 %s35, 1
    %s37 = scalar_select %p34, %s35, %s36
    %p40 = pneg %p34
    %p41 = scmp.eq.s32.totalorder %s11, 1
    %p42 = por %p40, %p41
    %p43 = scmp.ne.s32.totalorder %s35, %s38
    %p44 = scmp.eq.s32.totalorder %s11, 0
    %p45 = por %p43, %p44
    %p46 = scmp.ne.s32.totalorder %s35, %s38
    %p47 = scmp.eq.s32.totalorder %s16, 1
    %p48 = por %p46, %p47
    %p49 = scmp.ne.s32.totalorder %s38, %s39
    %p50 = scmp.eq.s32.totalorder %s16, 0
    %p51 = por %p49, %p50
    %p52 = scmp.ne.s32.totalorder %s38, %s39
    %p53 = scmp.eq.s32.totalorder %s17, 1
    %p54 = por %p52, %p53
    %p56 = scmp.ne.s32.totalorder %s39, %s55
    %p57 = scmp.eq.s32.totalorder %s17, 0
    %p58 = por %p56, %p57
    %s59 = ssub.s32 %s18, %s30
    %p60 = scmp.eq.s32.totalorder %s59, 0
    %s62 = sadd.s32 %s61, 1
    %s63 = scalar_select %p60, %s61, %s62
    %p66 = pneg %p60
    %p67 = scmp.eq.s32.totalorder %s11, 1
    %p68 = por %p66, %p67
    %p69 = scmp.ne.s32.totalorder %s61, %s64
    %p70 = scmp.eq.s32.totalorder %s11, 0
    %p71 = por %p69, %p70
    %p72 = scmp.ne.s32.totalorder %s61, %s64
    %p73 = scmp.eq.s32.totalorder %s16, 1
    %p74 = por %p72, %p73
    %p75 = scmp.ne.s32.totalorder %s64, %s65
    %p76 = scmp.eq.s32.totalorder %s16, 0
    %p77 = por %p75, %p76
    %p78 = scmp.ne.s32.totalorder %s64, %s65
    %p79 = scmp.eq.s32.totalorder %s17, 1
    %p80 = por %p78, %p79
    %p82 = scmp.ne.s32.totalorder %s65, %s81
    %p83 = scmp.eq.s32.totalorder %s17, 0
    %p84 = por %p82, %p83
    %s85 = ssub.s32 %s18, %s30
    %p86 = scmp.eq.s32.totalorder %s85, 0
    %s88 = sadd.s32 %s87, 1
    %s89 = scalar_select %p86, %s87, %s88
    %p92 = pneg %p86
    %p93 = scmp.eq.s32.totalorder %s11, 1
    %p94 = por %p92, %p93
    %p95 = scmp.ne.s32.totalorder %s87, %s90
    %p96 = scmp.eq.s32.totalorder %s11, 0
    %p97 = por %p95, %p96
    %p98 = scmp.ne.s32.totalorder %s87, %s90
    %p99 = scmp.eq.s32.totalorder %s16, 1
    %p100 = por %p98, %p99
    %p101 = scmp.ne.s32.totalorder %s90, %s91
    %p102 = scmp.eq.s32.totalorder %s16, 0
    %p103 = por %p101, %p102
    %p104 = scmp.ne.s32.totalorder %s90, %s91
    %p105 = scmp.eq.s32.totalorder %s17, 1
    %p106 = por %p104, %p105
    %p108 = scmp.ne.s32.totalorder %s91, %s107
    %p109 = scmp.eq.s32.totalorder %s17, 0
    %p110 = por %p108, %p109
    %s111 = ssub.s32 %s18, %s30
    %p112 = scmp.eq.s32.totalorder %s111, 0
    %s114 = sadd.s32 %s113, 1
    %s115 = scalar_select %p112, %s113, %s114
    %p118 = pneg %p112
    %p119 = scmp.eq.s32.totalorder %s11, 1
    %p120 = por %p118, %p119
    %p121 = scmp.ne.s32.totalorder %s113, %s116
    %p122 = scmp.eq.s32.totalorder %s11, 0
    %p123 = por %p121, %p122
    %p124 = scmp.ne.s32.totalorder %s113, %s116
    %p125 = scmp.eq.s32.totalorder %s16, 1
    %p126 = por %p124, %p125
    %p127 = scmp.ne.s32.totalorder %s116, %s117
    %p128 = scmp.eq.s32.totalorder %s16, 0
    %p129 = por %p127, %p128
    %p130 = scmp.ne.s32.totalorder %s116, %s117
    %p131 = scmp.eq.s32.totalorder %s17, 1
    %p132 = por %p130, %p131
    %p134 = scmp.ne.s32.totalorder %s117, %s133
    %p135 = scmp.eq.s32.totalorder %s17, 0
    %p136 = por %p134, %p135
    %s137 = ssub.s32 %s18, %s30
    %p138 = scmp.eq.s32.totalorder %s137, 0
    %s140 = sadd.s32 %s139, 1
    %s141 = scalar_select %p138, %s139, %s140
    %p144 = pneg %p138
    %p145 = scmp.eq.s32.totalorder %s11, 1
    %p146 = por %p144, %p145
    %p147 = scmp.ne.s32.totalorder %s139, %s142
    %p148 = scmp.eq.s32.totalorder %s11, 0
    %p149 = por %p147, %p148
    %p150 = scmp.ne.s32.totalorder %s139, %s142
    %p151 = scmp.eq.s32.totalorder %s16, 1
    %p152 = por %p150, %p151
    %p153 = scmp.ne.s32.totalorder %s142, %s143
    %p154 = scmp.eq.s32.totalorder %s16, 0
    %p155 = por %p153, %p154
    %p156 = scmp.ne.s32.totalorder %s142, %s143
    %p157 = scmp.eq.s32.totalorder %s17, 1
    %p158 = por %p156, %p157
    %p160 = scmp.ne.s32.totalorder %s143, %s159
    %p161 = scmp.eq.s32.totalorder %s17, 0
    %p162 = por %p160, %p161
    %s163 = ssub.s32 %s18, %s30
    %s164 = ssub.s32 %s19, %s26
    %s165 = sor.u32 %s163, %s164
    %p166 = scmp.eq.s32.totalorder %s165, 0
    %s168 = sadd.s32 %s167, 1
    %s169 = scalar_select %p166, %s167, %s168
    %p172 = pneg %p166
    %p173 = scmp.eq.s32.totalorder %s11, 1
    %p174 = por %p172, %p173
    %p175 = scmp.ne.s32.totalorder %s167, %s170
    %p176 = scmp.eq.s32.totalorder %s11, 0
    %p177 = por %p175, %p176
    %p178 = scmp.ne.s32.totalorder %s167, %s170
    %p179 = scmp.eq.s32.totalorder %s16, 1
    %p180 = por %p178, %p179
    %p181 = scmp.ne.s32.totalorder %s170, %s171
    %p182 = scmp.eq.s32.totalorder %s16, 0
    %p183 = por %p181, %p182
    %p184 = scmp.ne.s32.totalorder %s170, %s171
    %p185 = scmp.eq.s32.totalorder %s17, 1
    %p186 = por %p184, %p185
    %p188 = scmp.ne.s32.totalorder %s171, %s187
    %p189 = scmp.eq.s32.totalorder %s17, 0
    %p190 = por %p188, %p189
    %p191 = scmp.le.s32.totalorder 1, %s11
    %p192 = scmp.lt.s32.totalorder %s11, 3
    %p193 = pnand %p191, %p192
    %p194 = pneg %p193
    // Predicated region
    $region9: #{siamese_forward.1} parent=5 // pred_check
      _
    $region10: #{siamese_forward.1} parent=5 // pred_check_branch
      %196 = sbr.rel (%p193) target = $region12
    $region11: #{siamese_forward.1} parent=5 // pred_region
      %s197 = ssub.s32 %s11, 1
    $region12: #{siamese_forward.1} parent=5 // pred_fallthru
      _
    %p198 = scmp.lt.s32.totalorder %s11, 2
    // Predicated region
    $region13: #{siamese_forward.1} parent=5 // pred_check
      %p199 = pneg %p198
    $region14: #{siamese_forward.1} parent=5 // pred_check_branch
      %201 = sbr.rel (%p199) target = $region16
    $region15: #{siamese_forward.1} parent=5 // pred_region
      // Predicated region
      $region17: #{siamese_forward.1} parent=15 // pred_check
        %p202 = pneg %p45
      $region18: #{siamese_forward.1} parent=15 // pred_check_branch
        %204 = sbr.rel (%p202) target = $region20
      $region19: #{siamese_forward.1} parent=15 // pred_region
        %p205 = scmp.lt.s32.totalorder %s18, 1
        %s206 = scalar_select %p205, %s18, 1
        %p207 = scmp.lt.s32.totalorder %s19, 0
        %s208 = scalar_select %p207, %s19, 0
        %s209 = smul.addr %s208, 4
        %s210 = smul.addr %s206, 4
        %s211 = sadd.s32 %s209, %s210
        %s212 = smul.addr %s211, 4
        %s213 = scalar_lea.vmem %s0, %s212
      $region20: #{siamese_forward.1} parent=15 // pred_fallthru
        _
      // Predicated region
      $region21: #{siamese_forward.1} parent=15 // pred_check
        %p214 = pneg %p71
      $region22: #{siamese_forward.1} parent=15 // pred_check_branch
        %216 = sbr.rel (%p214) target = $region24
      $region23: #{siamese_forward.1} parent=15 // pred_region
        %p217 = scmp.lt.s32.totalorder %s18, 1
        %s218 = scalar_select %p217, %s18, 1
        %s219 = smul.addr %s218, 128
        %s220 = smul.addr %s219, 4
        %s221 = scalar_lea.vmem %s1, %s220
      $region24: #{siamese_forward.1} parent=15 // pred_fallthru
        _
      // Predicated region
      $region25: #{siamese_forward.1} parent=15 // pred_check
        %p222 = pneg %p97
      $region26: #{siamese_forward.1} parent=15 // pred_check_branch
        %224 = sbr.rel (%p222) target = $region28
      $region27: #{siamese_forward.1} parent=15 // pred_region
        %p225 = scmp.lt.s32.totalorder %s18, 1
        %s226 = scalar_select %p225, %s18, 1
        %s227 = smul.addr %s226, 2
        %s228 = scalar_lea.vmem %s2, %s227
      $region28: #{siamese_forward.1} parent=15 // pred_fallthru
        _
      // Predicated region
      $region29: #{siamese_forward.1} parent=15 // pred_check
        %p229 = pneg %p123
      $region30: #{siamese_forward.1} parent=15 // pred_check_branch
        %231 = sbr.rel (%p229) target = $region32
      $region31: #{siamese_forward.1} parent=15 // pred_region
        %p232 = scmp.lt.s32.totalorder %s18, 1
        %s233 = scalar_select %p232, %s18, 1
        %s234 = smul.addr %s233, 32
        %s235 = smul.addr %s234, 4
        %s236 = scalar_lea.vmem %s3, %s235
      $region32: #{siamese_forward.1} parent=15 // pred_fallthru
        _
      // Predicated region
      $region33: #{siamese_forward.1} parent=15 // pred_check
        %p237 = pneg %p149
      $region34: #{siamese_forward.1} parent=15 // pred_check_branch
        %239 = sbr.rel (%p237) target = $region36
      $region35: #{siamese_forward.1} parent=15 // pred_region
        %p240 = scmp.lt.s32.totalorder %s18, 1
        %s241 = scalar_select %p240, %s18, 1
        %s242 = scalar_lea.vmem %s4, %s241
      $region36: #{siamese_forward.1} parent=15 // pred_fallthru
        _
    $region16: #{siamese_forward.1} parent=5 // pred_fallthru
      _
    %p243 = scmp.le.s32.totalorder 1, %s11
    %p244 = scmp.lt.s32.totalorder %s11, 3
    %p245 = pnand %p243, %p244
    %p246 = pneg %p245
    // Predicated region
    $region37: #{siamese_forward.1} parent=5 // pred_check
      _
    $region38: #{siamese_forward.1} parent=5 // pred_check_branch
      %248 = sbr.rel (%p245) target = $region40
    $region39: #{siamese_forward.1} parent=5 // pred_region
      %s249 = ssub.s32 %s11, 1
      %p250 = scmp.lt.s32.totalorder %s20, 1
      %s251 = scalar_select %p250, %s20, 1
      %p252 = scmp.lt.s32.totalorder %s21, 0
      %s253 = scalar_select %p252, %s21, 0
      %s254 = smul.addr %s253, 4
      %s255 = smul.addr %s251, 4
      %s256 = sadd.s32 %s254, %s255
      %s257 = smul.addr %s256, 4
      %s258 = scalar_lea.vmem %s0, %s257
      %p259 = pneg %p51
      %p260 = pneg %p48
      %p261 = scmp.lt.s32.totalorder %s20, 1
      %s262 = scalar_select %p261, %s20, 1
      %s263 = smul.addr %s262, 128
      %s264 = smul.addr %s263, 4
      %s265 = scalar_lea.vmem %s1, %s264
      %p266 = pneg %p77
      %p267 = pneg %p74
      %p268 = scmp.lt.s32.totalorder %s20, 1
      %s269 = scalar_select %p268, %s20, 1
      %s270 = smul.addr %s269, 2
      %s271 = scalar_lea.vmem %s2, %s270
      %p272 = pneg %p103
      %p273 = pneg %p100
      %p274 = scmp.lt.s32.totalorder %s20, 1
      %s275 = scalar_select %p274, %s20, 1
      %s276 = smul.addr %s275, 32
      %s277 = smul.addr %s276, 4
      %s278 = scalar_lea.vmem %s3, %s277
      %p279 = pneg %p129
      %p280 = pneg %p126
      %p281 = scmp.lt.s32.totalorder %s20, 1
      %s282 = scalar_select %p281, %s20, 1
      %s283 = scalar_lea.vmem %s4, %s282
      %p284 = pneg %p155
      %p285 = pneg %p152
      %p286 = pneg %p183
      %p287 = pneg %p180
      %p288 = scmp.lt.s32.totalorder %s20, 1
      %s289 = scalar_select %p288, %s20, 1
      %p290 = scmp.lt.s32.totalorder %s21, 0
      %s291 = scalar_select %p290, %s21, 0
      %s292 = sadd.s32 %s291, %s289
      %s293 = smul.addr %s292, 8
      %s294 = scalar_lea.vmem %s5, %s293
      %p295 = scmp.lt.s32.totalorder %s20, 1
      %s296 = scalar_select %p295, %s20, 1
      %p297 = scmp.lt.s32.totalorder %s21, 0
      %s298 = scalar_select %p297, %s21, 0
      %s299 = smul.addr %s298, 4
      %s300 = smul.addr %s296, 4
      %s301 = sadd.s32 %s299, %s300
      %s302 = smul.addr %s301, 4
      %s303 = scalar_lea.vmem %s0, %s302
      %p304 = scmp.lt.s32.totalorder %s20, 1
      %s305 = scalar_select %p304, %s20, 1
      %s306 = smul.addr %s305, 128
      %s307 = smul.addr %s306, 4
      %s308 = scalar_lea.vmem %s1, %s307
      %p309 = scmp.lt.s32.totalorder %s20, 1
      %s310 = scalar_select %p309, %s20, 1
      %s311 = smul.addr %s310, 2
      %s312 = scalar_lea.vmem %s2, %s311
      %p313 = scmp.lt.s32.totalorder %s20, 1
      %s314 = scalar_select %p313, %s20, 1
      %s315 = smul.addr %s314, 32
      %s316 = smul.addr %s315, 4
      %s317 = scalar_lea.vmem %s3, %s316
      %p318 = scmp.lt.s32.totalorder %s20, 1
      %s319 = scalar_select %p318, %s20, 1
      %s320 = scalar_lea.vmem %s4, %s319
      %p321 = scmp.lt.s32.totalorder %s20, 1
      %s322 = scalar_select %p321, %s20, 1
      %p323 = scmp.lt.s32.totalorder %s21, 0
      %s324 = scalar_select %p323, %s21, 0
      %s325 = sadd.s32 %s324, %s322
      %s326 = smul.addr %s325, 8
      %s327 = scalar_lea.vmem %s5, %s326
      %v329 = vld [vmem:[%s303] sm:$0xff]
      %v330 = vld [vmem:[%s303 + $0x8] sm:$0xff]
      %v331 = vld [vmem:[%s308] sm:$0xff]
      %v332 = vld [vmem:[%s308 + $0x8] sm:$0xff]
      %v333 = vld [vmem:[%s308 + $0x10] sm:$0xff]
      %v334 = vld [vmem:[%s308 + $0x18] sm:$0xff]
      %v335 = vld [vmem:[%s308 + $0x20] sm:$0xff]
      %v336 = vld [vmem:[%s308 + $0x28] sm:$0xff]
      %v337 = vld [vmem:[%s308 + $0x30] sm:$0xff]
      %v338 = vld [vmem:[%s308 + $0x38] sm:$0xff]
      %v339 = vld [vmem:[%s308 + $0x40] sm:$0xff]
      %v340 = vld [vmem:[%s308 + $0x48] sm:$0xff]
      %v341 = vld [vmem:[%s308 + $0x50] sm:$0xff]
      %v342 = vld [vmem:[%s308 + $0x58] sm:$0xff]
      %v343 = vld [vmem:[%s308 + $0x60] sm:$0xff]
      %v344 = vld [vmem:[%s308 + $0x68] sm:$0xff]
      %v345 = vld [vmem:[%s308 + $0x70] sm:$0xff]
      %v346 = vld [vmem:[%s308 + $0x78] sm:$0xff]
      %v347 = vld [vmem:[%s308 + $0x80] sm:$0xff]
      %v348 = vld [vmem:[%s308 + $0x88] sm:$0xff]
      %v349 = vld [vmem:[%s308 + $0x90] sm:$0xff]
      %v350 = vld [vmem:[%s308 + $0x98] sm:$0xff]
      %v351 = vld [vmem:[%s308 + $0xa0] sm:$0xff]
      %v352 = vld [vmem:[%s308 + $0xa8] sm:$0xff]
      %v353 = vld [vmem:[%s308 + $0xb0] sm:$0xff]
      %v354 = vld [vmem:[%s308 + $0xb8] sm:$0xff]
      %v355 = vld [vmem:[%s308 + $0xc0] sm:$0xff]
      %v356 = vld [vmem:[%s308 + $0xc8] sm:$0xff]
      %v357 = vld [vmem:[%s308 + $0xd0] sm:$0xff]
      %v358 = vld [vmem:[%s308 + $0xd8] sm:$0xff]
      %v359 = vld [vmem:[%s308 + $0xe0] sm:$0xff]
      %v360 = vld [vmem:[%s308 + $0xe8] sm:$0xff]
      %v361 = vld [vmem:[%s308 + $0xf0] sm:$0xff]
      %v362 = vld [vmem:[%s308 + $0xf8] sm:$0xff]
      %v363 = vld [vmem:[%s308 + $0x100] sm:$0xff]
      %v364 = vld [vmem:[%s308 + $0x108] sm:$0xff]
      %v365 = vld [vmem:[%s308 + $0x110] sm:$0xff]
      %v366 = vld [vmem:[%s308 + $0x118] sm:$0xff]
      %v367 = vld [vmem:[%s308 + $0x120] sm:$0xff]
      %v368 = vld [vmem:[%s308 + $0x128] sm:$0xff]
      %v369 = vld [vmem:[%s308 + $0x130] sm:$0xff]
      %v370 = vld [vmem:[%s308 + $0x138] sm:$0xff]
      %v371 = vld [vmem:[%s308 + $0x140] sm:$0xff]
      %v372 = vld [vmem:[%s308 + $0x148] sm:$0xff]
      %v373 = vld [vmem:[%s308 + $0x150] sm:$0xff]
      %v374 = vld [vmem:[%s308 + $0x158] sm:$0xff]
      %v375 = vld [vmem:[%s308 + $0x160] sm:$0xff]
      %v376 = vld [vmem:[%s308 + $0x168] sm:$0xff]
      %v377 = vld [vmem:[%s308 + $0x170] sm:$0xff]
      %v378 = vld [vmem:[%s308 + $0x178] sm:$0xff]
      %v379 = vld [vmem:[%s308 + $0x180] sm:$0xff]
      %v380 = vld [vmem:[%s308 + $0x188] sm:$0xff]
      %v381 = vld [vmem:[%s308 + $0x190] sm:$0xff]
      %v382 = vld [vmem:[%s308 + $0x198] sm:$0xff]
      %v383 = vld [vmem:[%s308 + $0x1a0] sm:$0xff]
      %v384 = vld [vmem:[%s308 + $0x1a8] sm:$0xff]
      %v385 = vld [vmem:[%s308 + $0x1b0] sm:$0xff]
      %v386 = vld [vmem:[%s308 + $0x1b8] sm:$0xff]
      %v387 = vld [vmem:[%s308 + $0x1c0] sm:$0xff]
      %v388 = vld [vmem:[%s308 + $0x1c8] sm:$0xff]
      %v389 = vld [vmem:[%s308 + $0x1d0] sm:$0xff]
      %v390 = vld [vmem:[%s308 + $0x1d8] sm:$0xff]
      %v391 = vld [vmem:[%s308 + $0x1e0] sm:$0xff]
      %v392 = vld [vmem:[%s308 + $0x1e8] sm:$0xff]
      %v393 = vld [vmem:[%s308 + $0x1f0] sm:$0xff]
      %v394 = vld [vmem:[%s308 + $0x1f8] sm:$0xff]
      %v395 = vld [vmem:[%s312] sm:$0x3]
      %v397 = vlaneseq
      %v398 = vshrl.u32 %v397, 7
      %v399 = vsub.s32 0, %v398
      %v400 = vrot.slane %v395, %v399
      %v401 = vlaneseq
      %v402 = vshrl.u32 %v401, 7
      %v403 = vsub.s32 1, %v402
      %v404 = vrot.slane %v395, %v403
      %v409 = vunpack.c.l.b16 %v329
      %v410 = vunpack.c.h.b16 %v329
      %v411 = vunpack.c.l.b16 %v330
      %v412 = vunpack.c.h.b16 %v330
      %v413 = vpack.c.b16 %v409, %v409
      %v414 = vpack.c.b16 %v410, %v410
      %v415 = vpack.c.b16 %v411, %v411
      %v416 = vpack.c.b16 %v412, %v412
      %v485 = vunpack.c.l.b16 %v331
      %v486 = vunpack.c.h.b16 %v331
      %v487 = vunpack.c.l.b16 %v332
      %v488 = vunpack.c.h.b16 %v332
      %v489 = vunpack.c.l.b16 %v333
      %v490 = vunpack.c.h.b16 %v333
      %v491 = vunpack.c.l.b16 %v334
      %v492 = vunpack.c.h.b16 %v334
      %v493 = vunpack.c.l.b16 %v335
      %v494 = vunpack.c.h.b16 %v335
      %v495 = vunpack.c.l.b16 %v336
      %v496 = vunpack.c.h.b16 %v336
      %v497 = vunpack.c.l.b16 %v337
      %v498 = vunpack.c.h.b16 %v337
      %v499 = vunpack.c.l.b16 %v338
      %v500 = vunpack.c.h.b16 %v338
      %v501 = vunpack.c.l.b16 %v339
      %v502 = vunpack.c.h.b16 %v339
      %v503 = vunpack.c.l.b16 %v340
      %v504 = vunpack.c.h.b16 %v340
      %v505 = vunpack.c.l.b16 %v341
      %v506 = vunpack.c.h.b16 %v341
      %v507 = vunpack.c.l.b16 %v342
      %v508 = vunpack.c.h.b16 %v342
      %v509 = vunpack.c.l.b16 %v343
      %v510 = vunpack.c.h.b16 %v343
      %v511 = vunpack.c.l.b16 %v344
      %v512 = vunpack.c.h.b16 %v344
      %v513 = vunpack.c.l.b16 %v345
      %v514 = vunpack.c.h.b16 %v345
      %v515 = vunpack.c.l.b16 %v346
      %v516 = vunpack.c.h.b16 %v346
      %v517 = vunpack.c.l.b16 %v347
      %v518 = vunpack.c.h.b16 %v347
      %v519 = vunpack.c.l.b16 %v348
      %v520 = vunpack.c.h.b16 %v348
      %v521 = vunpack.c.l.b16 %v349
      %v522 = vunpack.c.h.b16 %v349
      %v523 = vunpack.c.l.b16 %v350
      %v524 = vunpack.c.h.b16 %v350
      %v525 = vunpack.c.l.b16 %v351
      %v526 = vunpack.c.h.b16 %v351
      %v527 = vunpack.c.l.b16 %v352
      %v528 = vunpack.c.h.b16 %v352
      %v529 = vunpack.c.l.b16 %v353
      %v530 = vunpack.c.h.b16 %v353
      %v531 = vunpack.c.l.b16 %v354
      %v532 = vunpack.c.h.b16 %v354
      %v533 = vunpack.c.l.b16 %v355
      %v534 = vunpack.c.h.b16 %v355
      %v535 = vunpack.c.l.b16 %v356
      %v536 = vunpack.c.h.b16 %v356
      %v537 = vunpack.c.l.b16 %v357
      %v538 = vunpack.c.h.b16 %v357
      %v539 = vunpack.c.l.b16 %v358
      %v540 = vunpack.c.h.b16 %v358
      %v541 = vunpack.c.l.b16 %v359
      %v542 = vunpack.c.h.b16 %v359
      %v543 = vunpack.c.l.b16 %v360
      %v544 = vunpack.c.h.b16 %v360
      %v545 = vunpack.c.l.b16 %v361
      %v546 = vunpack.c.h.b16 %v361
      %v547 = vunpack.c.l.b16 %v362
      %v548 = vunpack.c.h.b16 %v362
      %v549 = vunpack.c.l.b16 %v363
      %v550 = vunpack.c.h.b16 %v363
      %v551 = vunpack.c.l.b16 %v364
      %v552 = vunpack.c.h.b16 %v364
      %v553 = vunpack.c.l.b16 %v365
      %v554 = vunpack.c.h.b16 %v365
      %v555 = vunpack.c.l.b16 %v366
      %v556 = vunpack.c.h.b16 %v366
      %v557 = vunpack.c.l.b16 %v367
      %v558 = vunpack.c.h.b16 %v367
      %v559 = vunpack.c.l.b16 %v368
      %v560 = vunpack.c.h.b16 %v368
      %v561 = vunpack.c.l.b16 %v369
      %v562 = vunpack.c.h.b16 %v369
      %v563 = vunpack.c.l.b16 %v370
      %v564 = vunpack.c.h.b16 %v370
      %v565 = vunpack.c.l.b16 %v371
      %v566 = vunpack.c.h.b16 %v371
      %v567 = vunpack.c.l.b16 %v372
      %v568 = vunpack.c.h.b16 %v372
      %v569 = vunpack.c.l.b16 %v373
      %v570 = vunpack.c.h.b16 %v373
      %v571 = vunpack.c.l.b16 %v374
      %v572 = vunpack.c.h.b16 %v374
      %v573 = vunpack.c.l.b16 %v375
      %v574 = vunpack.c.h.b16 %v375
      %v575 = vunpack.c.l.b16 %v376
      %v576 = vunpack.c.h.b16 %v376
      %v577 = vunpack.c.l.b16 %v377
      %v578 = vunpack.c.h.b16 %v377
      %v579 = vunpack.c.l.b16 %v378
      %v580 = vunpack.c.h.b16 %v378
      %v581 = vunpack.c.l.b16 %v379
      %v582 = vunpack.c.h.b16 %v379
      %v583 = vunpack.c.l.b16 %v380
      %v584 = vunpack.c.h.b16 %v380
      %v585 = vunpack.c.l.b16 %v381
      %v586 = vunpack.c.h.b16 %v381
      %v587 = vunpack.c.l.b16 %v382
      %v588 = vunpack.c.h.b16 %v382
      %v589 = vunpack.c.l.b16 %v383
      %v590 = vunpack.c.h.b16 %v383
      %v591 = vunpack.c.l.b16 %v384
      %v592 = vunpack.c.h.b16 %v384
      %v593 = vunpack.c.l.b16 %v385
      %v594 = vunpack.c.h.b16 %v385
      %v595 = vunpack.c.l.b16 %v386
      %v596 = vunpack.c.h.b16 %v386
      %v597 = vunpack.c.l.b16 %v387
      %v598 = vunpack.c.h.b16 %v387
      %v599 = vunpack.c.l.b16 %v388
      %v600 = vunpack.c.h.b16 %v388
      %v601 = vunpack.c.l.b16 %v389
      %v602 = vunpack.c.h.b16 %v389
      %v603 = vunpack.c.l.b16 %v390
      %v604 = vunpack.c.h.b16 %v390
      %v605 = vunpack.c.l.b16 %v391
      %v606 = vunpack.c.h.b16 %v391
      %v607 = vunpack.c.l.b16 %v392
      %v608 = vunpack.c.h.b16 %v392
      %v609 = vunpack.c.l.b16 %v393
      %v610 = vunpack.c.h.b16 %v393
      %v611 = vunpack.c.l.b16 %v394
      %v612 = vunpack.c.h.b16 %v394
      %v613 = vpack.c.b16 %v487, %v485
      %v614 = vpack.c.b16 %v488, %v486
      %v615 = vpack.c.b16 %v491, %v489
      %v616 = vpack.c.b16 %v492, %v490
      %v617 = vpack.c.b16 %v495, %v493
      %v618 = vpack.c.b16 %v496, %v494
      %v619 = vpack.c.b16 %v499, %v497
      %v620 = vpack.c.b16 %v500, %v498
      %v621 = vpack.c.b16 %v503, %v501
      %v622 = vpack.c.b16 %v504, %v502
      %v623 = vpack.c.b16 %v507, %v505
      %v624 = vpack.c.b16 %v508, %v506
      %v625 = vpack.c.b16 %v511, %v509
      %v626 = vpack.c.b16 %v512, %v510
      %v627 = vpack.c.b16 %v515, %v513
      %v628 = vpack.c.b16 %v516, %v514
      %v629 = vpack.c.b16 %v519, %v517
      %v630 = vpack.c.b16 %v520, %v518
      %v631 = vpack.c.b16 %v523, %v521
      %v632 = vpack.c.b16 %v524, %v522
      %v633 = vpack.c.b16 %v527, %v525
      %v634 = vpack.c.b16 %v528, %v526
      %v635 = vpack.c.b16 %v531, %v529
      %v636 = vpack.c.b16 %v532, %v530
      %v637 = vpack.c.b16 %v535, %v533
      %v638 = vpack.c.b16 %v536, %v534
      %v639 = vpack.c.b16 %v539, %v537
      %v640 = vpack.c.b16 %v540, %v538
      %v641 = vpack.c.b16 %v543, %v541
      %v642 = vpack.c.b16 %v544, %v542
      %v643 = vpack.c.b16 %v547, %v545
      %v644 = vpack.c.b16 %v548, %v546
      %v645 = vpack.c.b16 %v551, %v549
      %v646 = vpack.c.b16 %v552, %v550
      %v647 = vpack.c.b16 %v555, %v553
      %v648 = vpack.c.b16 %v556, %v554
      %v649 = vpack.c.b16 %v559, %v557
      %v650 = vpack.c.b16 %v560, %v558
      %v651 = vpack.c.b16 %v563, %v561
      %v652 = vpack.c.b16 %v564, %v562
      %v653 = vpack.c.b16 %v567, %v565
      %v654 = vpack.c.b16 %v568, %v566
      %v655 = vpack.c.b16 %v571, %v569
      %v656 = vpack.c.b16 %v572, %v570
      %v657 = vpack.c.b16 %v575, %v573
      %v658 = vpack.c.b16 %v576, %v574
      %v659 = vpack.c.b16 %v579, %v577
      %v660 = vpack.c.b16 %v580, %v578
      %v661 = vpack.c.b16 %v583, %v581
      %v662 = vpack.c.b16 %v584, %v582
      %v663 = vpack.c.b16 %v587, %v585
      %v664 = vpack.c.b16 %v588, %v586
      %v665 = vpack.c.b16 %v591, %v589
      %v666 = vpack.c.b16 %v592, %v590
      %v667 = vpack.c.b16 %v595, %v593
      %v668 = vpack.c.b16 %v596, %v594
      %v669 = vpack.c.b16 %v599, %v597
      %v670 = vpack.c.b16 %v600, %v598
      %v671 = vpack.c.b16 %v603, %v601
      %v672 = vpack.c.b16 %v604, %v602
      %v673 = vpack.c.b16 %v607, %v605
      %v674 = vpack.c.b16 %v608, %v606
      %v675 = vpack.c.b16 %v611, %v609
      %v676 = vpack.c.b16 %v612, %v610
      %741 = vmatprep.subr.bf16.mxu0 %v614
      %742 = vmatpush1.bf16.msra.mxu0 %v613
      %743 = vmatprep.subr.bf16.mxu0 %v616
      %744 = vmatpush1.bf16.msra.mxu0 %v615
      %745 = vmatprep.subr.bf16.mxu0 %v618
      %746 = vmatpush1.bf16.msra.mxu0 %v617
      %747 = vmatprep.subr.bf16.mxu0 %v620
      %748 = vmatpush1.bf16.msra.mxu0 %v619
      %749 = vmatprep.subr.bf16.mxu0 %v622
      %750 = vmatpush1.bf16.msra.mxu0 %v621
      %751 = vmatprep.subr.bf16.mxu0 %v624
      %752 = vmatpush1.bf16.msra.mxu0 %v623
      %753 = vmatprep.subr.bf16.mxu0 %v626
      %754 = vmatpush1.bf16.msra.mxu0 %v625
      %755 = vmatprep.subr.bf16.mxu0 %v628
      %756 = vmatpush1.bf16.msra.mxu0 %v627
      %757 = vmatprep.subr.bf16.mxu0 %v630
      %758 = vmatpush1.bf16.msra.mxu0 %v629
      %759 = vmatprep.subr.bf16.mxu0 %v632
      %760 = vmatpush1.bf16.msra.mxu0 %v631
      %761 = vmatprep.subr.bf16.mxu0 %v634
      %762 = vmatpush1.bf16.msra.mxu0 %v633
      %763 = vmatprep.subr.bf16.mxu0 %v636
      %764 = vmatpush1.bf16.msra.mxu0 %v635
      %765 = vmatprep.subr.bf16.mxu0 %v638
      %766 = vmatpush1.bf16.msra.mxu0 %v637
      %767 = vmatprep.subr.bf16.mxu0 %v640
      %768 = vmatpush1.bf16.msra.mxu0 %v639
      %769 = vmatprep.subr.bf16.mxu0 %v642
      %770 = vmatpush1.bf16.msra.mxu0 %v641
      %771 = vmatprep.subr.bf16.mxu0 %v644
      %772 = vmatpush1.bf16.msra.mxu0 %v643
      %773 = vmatprep.mubr.bf16.mxu0 %v414
      %774 = vmatmul.mubr.bf16.gmra.mrb[0].mxu0 %v413
      %v775 = vpop.f32.mrb[0].mxu0
      %v776 = vadd.f32 %v400, %v775
      %v777 = vpop.f32.mrb[0].mxu0
      %v778 = vadd.f32 %v404, %v777
      %v779 = vpop.f32.mrb[0].mxu0
      %v780 = vpop.f32.mrb[0].mxu0
      %781 = vdwg.mxu0
      %782 = vmatprep.subr.bf16.mxu0 %v646
      %783 = vmatpush1.bf16.msra.mxu0 %v645
      %784 = vmatprep.subr.bf16.mxu0 %v648
      %785 = vmatpush1.bf16.msra.mxu0 %v647
      %786 = vmatprep.subr.bf16.mxu0 %v650
      %787 = vmatpush1.bf16.msra.mxu0 %v649
      %788 = vmatprep.subr.bf16.mxu0 %v652
      %789 = vmatpush1.bf16.msra.mxu0 %v651
      %790 = vmatprep.subr.bf16.mxu0 %v654
      %791 = vmatpush1.bf16.msra.mxu0 %v653
      %792 = vmatprep.subr.bf16.mxu0 %v656
      %793 = vmatpush1.bf16.msra.mxu0 %v655
      %794 = vmatprep.subr.bf16.mxu0 %v658
      %795 = vmatpush1.bf16.msra.mxu0 %v657
      %796 = vmatprep.subr.bf16.mxu0 %v660
      %797 = vmatpush1.bf16.msra.mxu0 %v659
      %798 = vmatprep.subr.bf16.mxu0 %v662
      %799 = vmatpush1.bf16.msra.mxu0 %v661
      %800 = vmatprep.subr.bf16.mxu0 %v664
      %801 = vmatpush1.bf16.msra.mxu0 %v663
      %802 = vmatprep.subr.bf16.mxu0 %v666
      %803 = vmatpush1.bf16.msra.mxu0 %v665
      %804 = vmatprep.subr.bf16.mxu0 %v668
      %805 = vmatpush1.bf16.msra.mxu0 %v667
      %806 = vmatprep.subr.bf16.mxu0 %v670
      %807 = vmatpush1.bf16.msra.mxu0 %v669
      %808 = vmatprep.subr.bf16.mxu0 %v672
      %809 = vmatpush1.bf16.msra.mxu0 %v671
      %810 = vmatprep.subr.bf16.mxu0 %v674
      %811 = vmatpush1.bf16.msra.mxu0 %v673
      %812 = vmatprep.subr.bf16.mxu0 %v676
      %813 = vmatpush1.bf16.msra.mxu0 %v675
      %814 = vmatprep.mubr.bf16.mxu0 %v416
      %815 = vmatmul.mubr.bf16.gmra.mrb[0].mxu0 %v415
      %v816 = vpop.f32.mrb[0].mxu0
      %v817 = vadd.f32 %v776, %v816
      %v818 = vpop.f32.mrb[0].mxu0
      %v819 = vadd.f32 %v778, %v818
      %v820 = vpop.f32.mrb[0].mxu0
      %v821 = vpop.f32.mrb[0].mxu0
      %822 = vdwg.mxu0
      %v823 = vmax.f32 %v817, 0.0
      %v824 = vmax.f32 %v819, 0.0
      %v825 = vpack.c.bf16 %v823, %v823
      %v826 = vpack.c.bf16 %v824, %v824
      %v827 = vld [vmem:[%s317] sm:$0xf]
      %v828 = vld [vmem:[%s317 + $0x4] sm:$0xf]
      %v829 = vld [vmem:[%s317 + $0x8] sm:$0xf]
      %v830 = vld [vmem:[%s317 + $0xc] sm:$0xf]
      %v831 = vld [vmem:[%s317 + $0x10] sm:$0xf]
      %v832 = vld [vmem:[%s317 + $0x14] sm:$0xf]
      %v833 = vld [vmem:[%s317 + $0x18] sm:$0xf]
      %v834 = vld [vmem:[%s317 + $0x1c] sm:$0xf]
      %v835 = vld [vmem:[%s317 + $0x20] sm:$0xf]
      %v836 = vld [vmem:[%s317 + $0x24] sm:$0xf]
      %v837 = vld [vmem:[%s317 + $0x28] sm:$0xf]
      %v838 = vld [vmem:[%s317 + $0x2c] sm:$0xf]
      %v839 = vld [vmem:[%s317 + $0x30] sm:$0xf]
      %v840 = vld [vmem:[%s317 + $0x34] sm:$0xf]
      %v841 = vld [vmem:[%s317 + $0x38] sm:$0xf]
      %v842 = vld [vmem:[%s317 + $0x3c] sm:$0xf]
      %v843 = vld [vmem:[%s317 + $0x40] sm:$0xf]
      %v844 = vld [vmem:[%s317 + $0x44] sm:$0xf]
      %v845 = vld [vmem:[%s317 + $0x48] sm:$0xf]
      %v846 = vld [vmem:[%s317 + $0x4c] sm:$0xf]
      %v847 = vld [vmem:[%s317 + $0x50] sm:$0xf]
      %v848 = vld [vmem:[%s317 + $0x54] sm:$0xf]
      %v849 = vld [vmem:[%s317 + $0x58] sm:$0xf]
      %v850 = vld [vmem:[%s317 + $0x5c] sm:$0xf]
      %v851 = vld [vmem:[%s317 + $0x60] sm:$0xf]
      %v852 = vld [vmem:[%s317 + $0x64] sm:$0xf]
      %v853 = vld [vmem:[%s317 + $0x68] sm:$0xf]
      %v854 = vld [vmem:[%s317 + $0x6c] sm:$0xf]
      %v855 = vld [vmem:[%s317 + $0x70] sm:$0xf]
      %v856 = vld [vmem:[%s317 + $0x74] sm:$0xf]
      %v857 = vld [vmem:[%s317 + $0x78] sm:$0xf]
      %v858 = vld [vmem:[%s317 + $0x7c] sm:$0xf]
      %v859 = vld [vmem:[%s320] sm:$0x1]
      %v861 = vlaneseq
      %v862 = vshrl.u32 %v861, 7
      %v863 = vsub.s32 0, %v862
      %v864 = vrot.slane %v859, %v863
      %v898 = vunpack.c.l.b16 %v827
      %v899 = vunpack.c.l.b16 %v828
      %v900 = vunpack.c.l.b16 %v829
      %v901 = vunpack.c.l.b16 %v830
      %v902 = vunpack.c.l.b16 %v831
      %v903 = vunpack.c.l.b16 %v832
      %v904 = vunpack.c.l.b16 %v833
      %v905 = vunpack.c.l.b16 %v834
      %v906 = vunpack.c.l.b16 %v835
      %v907 = vunpack.c.l.b16 %v836
      %v908 = vunpack.c.l.b16 %v837
      %v909 = vunpack.c.l.b16 %v838
      %v910 = vunpack.c.l.b16 %v839
      %v911 = vunpack.c.l.b16 %v840
      %v912 = vunpack.c.l.b16 %v841
      %v913 = vunpack.c.l.b16 %v842
      %v914 = vunpack.c.l.b16 %v843
      %v915 = vunpack.c.l.b16 %v844
      %v916 = vunpack.c.l.b16 %v845
      %v917 = vunpack.c.l.b16 %v846
      %v918 = vunpack.c.l.b16 %v847
      %v919 = vunpack.c.l.b16 %v848
      %v920 = vunpack.c.l.b16 %v849
      %v921 = vunpack.c.l.b16 %v850
      %v922 = vunpack.c.l.b16 %v851
      %v923 = vunpack.c.l.b16 %v852
      %v924 = vunpack.c.l.b16 %v853
      %v925 = vunpack.c.l.b16 %v854
      %v926 = vunpack.c.l.b16 %v855
      %v927 = vunpack.c.l.b16 %v856
      %v928 = vunpack.c.l.b16 %v857
      %v929 = vunpack.c.l.b16 %v858
      %v930 = vpack.c.b16 %v899, %v898
      %v931 = vpack.c.b16 %v901, %v900
      %v932 = vpack.c.b16 %v903, %v902
      %v933 = vpack.c.b16 %v905, %v904
      %v934 = vpack.c.b16 %v907, %v906
      %v935 = vpack.c.b16 %v909, %v908
      %v936 = vpack.c.b16 %v911, %v910
      %v937 = vpack.c.b16 %v913, %v912
      %v938 = vpack.c.b16 %v915, %v914
      %v939 = vpack.c.b16 %v917, %v916
      %v940 = vpack.c.b16 %v919, %v918
      %v941 = vpack.c.b16 %v921, %v920
      %v942 = vpack.c.b16 %v923, %v922
      %v943 = vpack.c.b16 %v925, %v924
      %v944 = vpack.c.b16 %v927, %v926
      %v945 = vpack.c.b16 %v929, %v928
      %962 = vmatprep.subr.bf16.mxu0 0
      %963 = vmatpush1.bf16.msra.mxu0 %v930
      %964 = vmatprep.subr.bf16.mxu0 0
      %965 = vmatpush1.bf16.msra.mxu0 %v931
      %966 = vmatprep.subr.bf16.mxu0 0
      %967 = vmatpush1.bf16.msra.mxu0 %v932
      %968 = vmatprep.subr.bf16.mxu0 0
      %969 = vmatpush1.bf16.msra.mxu0 %v933
      %970 = vmatprep.subr.bf16.mxu0 0
      %971 = vmatpush1.bf16.msra.mxu0 %v934
      %972 = vmatprep.subr.bf16.mxu0 0
      %973 = vmatpush1.bf16.msra.mxu0 %v935
      %974 = vmatprep.subr.bf16.mxu0 0
      %975 = vmatpush1.bf16.msra.mxu0 %v936
      %976 = vmatprep.subr.bf16.mxu0 0
      %977 = vmatpush1.bf16.msra.mxu0 %v937
      %978 = vmatprep.subr.bf16.mxu0 0
      %979 = vmatpush1.bf16.msra.mxu0 %v938
      %980 = vmatprep.subr.bf16.mxu0 0
      %981 = vmatpush1.bf16.msra.mxu0 %v939
      %982 = vmatprep.subr.bf16.mxu0 0
      %983 = vmatpush1.bf16.msra.mxu0 %v940
      %984 = vmatprep.subr.bf16.mxu0 0
      %985 = vmatpush1.bf16.msra.mxu0 %v941
      %986 = vmatprep.subr.bf16.mxu0 0
      %987 = vmatpush1.bf16.msra.mxu0 %v942
      %988 = vmatprep.subr.bf16.mxu0 0
      %989 = vmatpush1.bf16.msra.mxu0 %v943
      %990 = vmatprep.subr.bf16.mxu0 0
      %991 = vmatpush1.bf16.msra.mxu0 %v944
      %992 = vmatprep.subr.bf16.mxu0 0
      %993 = vmatpush1.bf16.msra.mxu0 %v945
      %994 = vmatprep.mubr.bf16.mxu0 %v826
      %995 = vmatmul.mubr.bf16.gmra.mrb[0].mxu0 %v825
      %v996 = vpop.f32.mrb[0].mxu0
      %v997 = vadd.f32 %v864, %v996
      %v998 = vpop.f32.mrb[0].mxu0
      %v999 = vpop.f32.mrb[0].mxu0
      %v1000 = vpop.f32.mrb[0].mxu0
      %1001 = vdwg.mxu0
      %1002 = vst [vmem:[%s327] sm:$0xff] %v997
      %p1003 = scmp.lt.s32.totalorder %s20, 1
      %s1004 = scalar_select %p1003, %s20, 1
      %p1005 = scmp.lt.s32.totalorder %s21, 0
      %s1006 = scalar_select %p1005, %s21, 0
      %s1007 = sadd.s32 %s1006, %s1004
      %s1008 = smul.addr %s1007, 8
      %s1009 = scalar_lea.vmem %s5, %s1008
      // Predicated region
      $region41: #{siamese_forward.1} parent=39 // pred_check
        %p1010 = pneg %p180
      $region42: #{siamese_forward.1} parent=39 // pred_check_branch
        %1012 = sbr.rel (%p1010) target = $region44
      $region43: #{siamese_forward.1} parent=39 // pred_region
        _
      $region44: #{siamese_forward.1} parent=39 // pred_fallthru
        _
    $region40: #{siamese_forward.1} parent=5 // pred_fallthru
      _
    %p1013 = scmp.le.s32.totalorder 2, %s11
    // Predicated region
    $region45: #{siamese_forward.1} parent=5 // pred_check
      %p1014 = pneg %p1013
    $region46: #{siamese_forward.1} parent=5 // pred_check_branch
      %1016 = sbr.rel (%p1014) target = $region48
    $region47: #{siamese_forward.1} parent=5 // pred_region
      %s1017 = ssub.s32 %s11, 2
      // Predicated region
      $region49: #{siamese_forward.1} parent=47 // pred_check
        %p1018 = pneg %p186
      $region50: #{siamese_forward.1} parent=47 // pred_check_branch
        %1020 = sbr.rel (%p1018) target = $region52
      $region51: #{siamese_forward.1} parent=47 // pred_region
        %p1021 = scmp.lt.s32.totalorder %s22, 1
        %s1022 = scalar_select %p1021, %s22, 1
        %p1023 = scmp.lt.s32.totalorder %s23, 0
        %s1024 = scalar_select %p1023, %s23, 0
        %s1025 = sadd.s32 %s1024, %s1022
        %s1026 = smul.addr %s1025, 8
        %s1027 = scalar_lea.vmem %s5, %s1026
      $region52: #{siamese_forward.1} parent=47 // pred_fallthru
        _
    $region48: #{siamese_forward.1} parent=5 // pred_fallthru
      _
  $region6: #{siamese_forward.1} parent=0 // loop_footer
    %s15 = sadd.s32 1, %s11
  $region7: #{siamese_forward.1} parent=0 // loop_footer_branch
    %10 = sbr.rel target = $region3
  $region8: #{siamese_forward.1} parent=0 // loop_exit
    _

</llo_original>
